<compile_context>
chip_gen: v7x
topology: tpu7x:2x2x1
jax: 0.10.0
libtpu: 0.0.40
codegen_flags: <defaults>
</compile_context>

<pallas_src>
import functools
import math

import jax
import jax.numpy as jnp
from jax import lax
from jax.experimental import pallas as pl
from jax.experimental.pallas import tpu as pltpu


def _exact_gelu(x):
    # PyTorch F.gelu default ("none" approximation): 0.5*x*(1+erf(x/sqrt(2)))
    return 0.5 * x * (1.0 + lax.erf(x * (1.0 / math.sqrt(2.0))))


def _megatron_mlp_kernel(x_ref, w1_ref, w2_ref, o_ref, acc_ref):
    """One grid step: token tile TM x ffn tile TF.

    x_ref  : (TM, H)   activations for this token tile
    w1_ref : (H, TF)   fc1 weight slice (already transposed)
    w2_ref : (TF, H)   fc2 weight slice (already transposed)
    o_ref  : (TM, H)   output tile (written on the last ffn step)
    acc_ref: (TM, H)   f32 accumulator scratch
    """
    f = pl.program_id(1)

    @pl.when(f == 0)
    def _init():
        acc_ref[...] = jnp.zeros_like(acc_ref)

    # fc1 tile -> f32 accumulate on the MXU.
    fc1 = jnp.dot(x_ref[...], w1_ref[...], preferred_element_type=jnp.float32)
    # Exact erf GELU in f32 (matches torch.nn.functional.gelu default).
    act = _exact_gelu(fc1)
    # fc2 partial product, accumulated over ffn tiles in f32.
    acc_ref[...] += jnp.dot(act.astype(w2_ref.dtype), w2_ref[...],
                            preferred_element_type=jnp.float32)

    @pl.when(f == pl.num_programs(1) - 1)
    def _finalize():
        o_ref[...] = acc_ref[...].astype(o_ref.dtype)


def _pick_tile(dim, candidates):
    for c in candidates:
        if dim % c == 0:
            return c
    return dim  # fall back to the full (untiled) dimension


@functools.partial(jax.jit, static_argnames=("tm", "tf"))
def megatron_mlp_forward(hidden_state, weight_1, weight_2, *, tm=None, tf=None):
    """out = gelu(hidden_state @ weight_1.T) @ weight_2.T (no biases)."""
    orig_shape = hidden_state.shape
    H = orig_shape[-1]
    x = hidden_state.reshape(-1, H)
    T = x.shape[0]
    Fp, H1 = weight_1.shape
    H2, Fp2 = weight_2.shape
    assert H1 == H and H2 == H and Fp2 == Fp, "weight shapes inconsistent"

    if tm is None:
        tm = _pick_tile(T, (512, 256, 128, 64, 32, 16, 8))
    if tf is None:
        tf = _pick_tile(Fp, (1024, 512, 256, 128))
    assert T % tm == 0 and Fp % tf == 0

    # One-time layout change so both in-kernel dots are plain row-major MXU
    # matmuls; in a real model the weights would be stored pre-transposed.
    w1_t = weight_1.T          # (H, Fp)
    w2_t = weight_2.T          # (Fp, H)

    itemsize = jnp.dtype(hidden_state.dtype).itemsize
    # Double-buffered tiles + f32 accumulator + live fc1 tile, with headroom.
    vmem_est = (2 * (tm * H) * itemsize          # x tiles
                + 2 * (H * tf) * itemsize        # w1 tiles
                + 2 * (tf * H) * itemsize        # w2 tiles
                + 2 * (tm * H) * itemsize        # out tiles
                + (tm * H) * 4                   # accumulator scratch
                + (tm * tf) * 4)                 # fc1/act intermediate
    vmem_limit = int(min(max(vmem_est * 3 // 2, 8 * 1024 * 1024),
                         64 * 1024 * 1024))      # stay within v7x physical VMEM

    cost = pl.CostEstimate(
        flops=4 * T * H * Fp,                    # two (T,H,Fp) matmuls
        transcendentals=T * Fp,                  # erf per fc1 element
        bytes_accessed=(2 * T * H + 2 * H * Fp) * itemsize)

    out = pl.pallas_call(
        _megatron_mlp_kernel,
        out_shape=jax.ShapeDtypeStruct((T, H), hidden_state.dtype),
        grid_spec=pltpu.PrefetchScalarGridSpec(
            num_scalar_prefetch=0,
            grid=(T // tm, Fp // tf),
            in_specs=[
                pl.BlockSpec((tm, H), lambda t, f: (t, 0)),   # x: fixed across f
                pl.BlockSpec((H, tf), lambda t, f: (0, f)),   # w1.T slice
                pl.BlockSpec((tf, H), lambda t, f: (f, 0)),   # w2.T slice
            ],
            out_specs=pl.BlockSpec((tm, H), lambda t, f: (t, 0)),
            scratch_shapes=[pltpu.VMEM((tm, H), jnp.float32)],
        ),
        compiler_params=pltpu.CompilerParams(
            dimension_semantics=("parallel", "arbitrary"),
            vmem_limit_bytes=vmem_limit),
        cost_estimate=cost,
    )(x, w1_t, w2_t)

    return out.reshape(orig_shape)


class MegatronMlpPallas:
    """Mirror of the PyTorch MegatronMlp (add_bias_linear=False, exact GELU)."""

    def __init__(self, *, hidden_size, ffn_hidden_size, tp=1,
                 enable_sequence_parallel=False, dtype=jnp.bfloat16,
                 seed=0, tm=None, tf=None):
        self.tp = tp
        self.enable_sequence_parallel = enable_sequence_parallel
        self.hidden_size = hidden_size
        ffn_per_partition = ffn_hidden_size // tp
        self.tm, self.tf = tm, tf

        k1, k2 = jax.random.split(jax.random.PRNGKey(seed))
        # torch.rand -> uniform [0, 1)
        self.weight_1 = jax.random.uniform(
            k1, (ffn_per_partition, hidden_size), dtype=jnp.float32).astype(dtype)
        self.weight_2 = jax.random.uniform(
            k2, (hidden_size, ffn_per_partition), dtype=jnp.float32).astype(dtype)
        # add_bias_linear=False in the reference path -> no bias applied
        # (the PyTorch module's self.bias is torch.empty and never used).

    def forward(self, hidden_state):
        out = megatron_mlp_forward(hidden_state, self.weight_1, self.weight_2,
                                   tm=self.tm, tf=self.tf)
        # TODO(synk): cuda_timing_decorator per-sub-op wall-clock timings have no
        # Pallas equivalent for a single fused kernel; return 0.0 placeholders
        # for (linear1, activation, linear2) times.
        return out, 0.0, 0.0, 0.0


def _reference(hidden_state, weight_1, weight_2):
    x = hidden_state.astype(jnp.float32).reshape(-1, hidden_state.shape[-1])
    fc1 = x @ weight_1.astype(jnp.float32).T
    act = _exact_gelu(fc1)
    # Match the kernel's cast of the activation to the weight dtype before fc2.
    act = act.astype(weight_2.dtype).astype(jnp.float32)
    out = act @ weight_2.astype(jnp.float32).T
    return out.reshape(hidden_state.shape)


if __name__ == "__main__":
    # Small shapes consistent with the module: seq=64, micro_batch=2,
    # hidden=128, ffn_hidden=256, tp=1.  tm=64, tf=128 -> grid (2, 2) so both
    # the parallel token axis and the ffn reduction/accumulator path run.
    hidden_size, ffn_hidden_size = 128, 256
    seq_len, micro_batch = 64, 2

    layer = MegatronMlpPallas(hidden_size=hidden_size,
                              ffn_hidden_size=ffn_hidden_size,
                              tp=1, dtype=jnp.bfloat16, seed=0,
                              tm=64, tf=128)

    key = jax.random.PRNGKey(0)
    hidden_state = jax.random.normal(
        key, (seq_len, micro_batch, hidden_size), dtype=jnp.float32
    ).astype(jnp.bfloat16)

    out, t1, t_act, t2 = layer.forward(hidden_state)
    out = jax.block_until_ready(out)
    assert out.shape == hidden_state.shape

    ref = _reference(hidden_state, layer.weight_1, layer.weight_2)
    # bf16 output + bf16 activation cast: check *relative* error.  (The previous
    # failure was an absolute 0.25 tolerance applied to O(100)-magnitude bf16
    # outputs, where ~0.4% rounding error is expected and correct.)
    rel_err = jnp.max(jnp.abs(out.astype(jnp.float32) - ref) / (jnp.abs(ref) + 1.0))
    assert float(rel_err) < 2e-2, f"relative error too large: {rel_err}"

    print("KERNEL_OK")
</pallas_src>

<mosaic_0001>
module attributes {stable_mosaic.version = 11 : i64} {
  func.func @_megatron_mlp_kernel(%arg0: i32, %arg1: i32, %arg2: memref<64x128xbf16, #tpu.memory_space<vmem>>, %arg3: memref<128x128xbf16, #tpu.memory_space<vmem>>, %arg4: memref<128x128xbf16, #tpu.memory_space<vmem>>, %arg5: memref<64x128xbf16, #tpu.memory_space<vmem>>, %arg6: memref<64x128xf32, #tpu.memory_space<vmem>>) attributes {dimension_semantics = [#tpu.dimension_semantics<parallel>, #tpu.dimension_semantics<arbitrary>], iteration_bounds = array<i64: 2, 2>, scalar_prefetch = 0 : i64, scratch_operands = 1 : i64, tpu.core_type = #tpu.core_type<tc>, window_params = [{transform_indices = @transform_0, window_bounds = array<i64: 64, 128>}, {transform_indices = @transform_1, window_bounds = array<i64: 128, 128>}, {transform_indices = @transform_2, window_bounds = array<i64: 128, 128>}, {transform_indices = @transform_3, window_bounds = array<i64: 64, 128>}]} {
    %c0_i32 = arith.constant 0 : i32
    %0 = arith.cmpi eq, %arg1, %c0_i32 : i32
    %1 = arith.extui %0 : i1 to i32
    %c0_i32_0 = arith.constant 0 : i32
    %2 = arith.cmpi ne, %1, %c0_i32_0 : i32
    scf.if %2 {
      %cst_15 = arith.constant 0.000000e+00 : f32
      %23 = vector.broadcast %cst_15 : f32 to vector<64x128xf32>
      %c0_16 = arith.constant 0 : index
      %c0_17 = arith.constant 0 : index
      %24 = vector.load %arg6[%c0_16, %c0_17] : memref<64x128xf32, #tpu.memory_space<vmem>>, vector<64x128xf32>
      tpu.vector_store %arg6[%c0_16, %c0_17], %23 {strides = array<i32>} : memref<64x128xf32, #tpu.memory_space<vmem>>, vector<64x128xf32>,
    } else {
    }
    %c0 = arith.constant 0 : index
    %c0_1 = arith.constant 0 : index
    %3 = vector.load %arg2[%c0, %c0_1] : memref<64x128xbf16, #tpu.memory_space<vmem>>, vector<64x128xbf16>
    %c0_2 = arith.constant 0 : index
    %c0_3 = arith.constant 0 : index
    %4 = vector.load %arg3[%c0_2, %c0_3] : memref<128x128xbf16, #tpu.memory_space<vmem>>, vector<128x128xbf16>
    %cst = arith.constant dense<0.000000e+00> : vector<64x128xf32>
    %5 = tpu.matmul %3, %4, %cst {dimension_numbers = #tpu.dot_dimension_numbers<[1], [0], [0], [1], [0, 0, 1, 1], [], []>} : vector<64x128xbf16>, vector<128x128xbf16>, vector<64x128xf32> -> vector<64x128xf32>
    %cst_4 = arith.constant 5.000000e-01 : f32
    %6 = vector.broadcast %cst_4 : f32 to vector<64x128xf32>
    %7 = arith.mulf %6, %5 : vector<64x128xf32>
    %cst_5 = arith.constant 0.707106769 : f32
    %8 = vector.broadcast %cst_5 : f32 to vector<64x128xf32>
    %9 = arith.mulf %5, %8 : vector<64x128xf32>
    %10 = math.erf %9 : vector<64x128xf32>
    %cst_6 = arith.constant 1.000000e+00 : f32
    %11 = vector.broadcast %cst_6 : f32 to vector<64x128xf32>
    %12 = arith.addf %11, %10 : vector<64x128xf32>
    %13 = arith.mulf %7, %12 : vector<64x128xf32>
    %c0_7 = arith.constant 0 : index
    %c0_8 = arith.constant 0 : index
    %14 = vector.load %arg6[%c0_7, %c0_8] : memref<64x128xf32, #tpu.memory_space<vmem>>, vector<64x128xf32>
    %15 = arith.truncf %13 : vector<64x128xf32> to vector<64x128xbf16>
    %c0_9 = arith.constant 0 : index
    %c0_10 = arith.constant 0 : index
    %16 = vector.load %arg4[%c0_9, %c0_10] : memref<128x128xbf16, #tpu.memory_space<vmem>>, vector<128x128xbf16>
    %cst_11 = arith.constant dense<0.000000e+00> : vector<64x128xf32>
    %17 = tpu.matmul %15, %16, %cst_11 {dimension_numbers = #tpu.dot_dimension_numbers<[1], [0], [0], [1], [0, 0, 1, 1], [], []>} : vector<64x128xbf16>, vector<128x128xbf16>, vector<64x128xf32> -> vector<64x128xf32>
    %18 = arith.addf %14, %17 : vector<64x128xf32>
    %c0_12 = arith.constant 0 : index
    %c0_13 = arith.constant 0 : index
    %19 = vector.load %arg6[%c0_12, %c0_13] : memref<64x128xf32, #tpu.memory_space<vmem>>, vector<64x128xf32>
    tpu.vector_store %arg6[%c0_12, %c0_13], %18 {strides = array<i32>} : memref<64x128xf32, #tpu.memory_space<vmem>>, vector<64x128xf32>,
    %c1_i32 = arith.constant 1 : i32
    %20 = arith.cmpi eq, %arg1, %c1_i32 : i32
    %21 = arith.extui %20 : i1 to i32
    %c0_i32_14 = arith.constant 0 : i32
    %22 = arith.cmpi ne, %21, %c0_i32_14 : i32
    scf.if %22 {
      %c0_15 = arith.constant 0 : index
      %c0_16 = arith.constant 0 : index
      %23 = vector.load %arg6[%c0_15, %c0_16] : memref<64x128xf32, #tpu.memory_space<vmem>>, vector<64x128xf32>
      %24 = arith.truncf %23 : vector<64x128xf32> to vector<64x128xbf16>
      %c0_17 = arith.constant 0 : index
      %c0_18 = arith.constant 0 : index
      %25 = vector.load %arg5[%c0_17, %c0_18] : memref<64x128xbf16, #tpu.memory_space<vmem>>, vector<64x128xbf16>
      tpu.vector_store %arg5[%c0_17, %c0_18], %24 {strides = array<i32>} : memref<64x128xbf16, #tpu.memory_space<vmem>>, vector<64x128xbf16>,
    } else {
    }
    return
  }
  func.func @transform_0(%arg0: i32, %arg1: i32) -> (i32, i32) {
    %c0_i32 = arith.constant 0 : i32
    %c0_i32_0 = arith.constant 0 : i32
    return %arg0, %c0_i32 : i32, i32
  }
  func.func @transform_1(%arg0: i32, %arg1: i32) -> (i32, i32) {
    %c0_i32 = arith.constant 0 : i32
    %c0_i32_0 = arith.constant 0 : i32
    return %c0_i32, %arg1 : i32, i32
  }
  func.func @transform_2(%arg0: i32, %arg1: i32) -> (i32, i32) {
    %c0_i32 = arith.constant 0 : i32
    %c0_i32_0 = arith.constant 0 : i32
    return %arg1, %c0_i32 : i32, i32
  }
  func.func @transform_3(%arg0: i32, %arg1: i32) -> (i32, i32) {
    %c0_i32 = arith.constant 0 : i32
    %c0_i32_0 = arith.constant 0 : i32
    return %arg0, %c0_i32 : i32, i32
  }
}

</mosaic_0001>

<llo_original>
// kernel: megatron_mlp_forward.1
$region0: #{megatron_mlp_forward.1}
  #allocation0 [shape = 'u32[]', space=smem, size = 0x4, offset = 0x4, fixed_abs, tag = 'smem constant byte address 0x4 - core index']
  #allocation1 [shape = 'u32[144,128]{1,0:T(1,128)}', space=vmem, size = 0x12000, scoped, tag = 'internal scratch']
  #allocation2 [shape = 'f32[64,128]{1,0:T(8,128)}', space=vmem, size = 0x8000, scoped, tag = 'scratch operand']
  %s0 = inlined_call_operand.vmem [shape: bf16[128,128], index: 0, kind: input, shape index: {}]
  %s1 = inlined_call_operand.vmem [shape: bf16[128,256], index: 1, kind: input, shape index: {}]
  %s2 = inlined_call_operand.vmem [shape: bf16[256,128], index: 2, kind: input, shape index: {}]
  %s3 = inlined_call_operand.hbm [shape: bf16[128,128], index: 3, kind: output, shape index: {}]
  %s4 = sld [smem:[#allocation0]]
  $region94: #{megatron_mlp_forward.1} parent=0
    _
  %s6 = ssub.s32 1, %s4
  %s7 = scalar_select 0, %s6, %s4
  $region1: #{megatron_mlp_forward.1} parent=0
    #allocation3 [shape = 'u8[65536]{0}', space=vmem, size = 0x10000, scoped, tag = 'input window, operand 1']
    #allocation4 [shape = 'u8[32768]{0}', space=vmem, size = 0x8000, scoped, tag = 'output window, operand 0']
    #allocation5 [shape = 's32[2]{0}', space=sflag, size = 0x8, scoped, tag = 'scoped memory for megatron_mlp_forward.1']
    %8 = vsyncpa [#allocation5], 0
    %s9 = scalar_lea.sflag [#allocation5], 1
    %10 = vsyncpa %s9, 0
    loop: start=0, step=1, limit=6
    $region2: #{megatron_mlp_forward.1} parent=1 // loop_pre_header
      _
    $region3: #{megatron_mlp_forward.1} parent=1 // loop_header
      %s12 = sphi 0, %s16
      %p13 = scmp.ge.s32.totalorder %s12, 6
      %s19 = sphi 0, %s31
      %s20 = sphi 0, %s27
      %s21 = sphi 0, %s19
      %s22 = sphi 0, %s20
      %s23 = sphi 0, %s21
      %s24 = sphi 0, %s22
      %s34 = sphi 0, %s36
      %s37 = sphi 0, %s34
      %s38 = sphi 0, %s37
      %s54 = sphi 0, %s38
      %s60 = sphi 0, %s62
      %s63 = sphi 0, %s60
      %s64 = sphi 0, %s63
      %s80 = sphi 0, %s64
      %s86 = sphi 0, %s88
      %s89 = sphi 0, %s86
      %s90 = sphi 0, %s89
      %s106 = sphi 0, %s90
      %s112 = sphi 0, %s114
      %s115 = sphi 0, %s112
      %s116 = sphi 0, %s115
      %s132 = sphi 0, %s116
    $region4: #{megatron_mlp_forward.1} parent=1 // loop_header_branch
      %15 = sbr.rel (%p13) target = $region8
    $region5: #{megatron_mlp_forward.1} parent=1 // loop_body
      %s17 = ssub.s32 %s12, 1
      %s18 = ssub.s32 %s12, 2
      %s25 = sadd.s32 1, %s20
      %p26 = scmp.ge.s32.totalorder %s25, 2
      %s27 = scalar_select %p26, 0, %s25
      %s28 = sadd.s32 1, %s19
      %s29 = scalar_select %p26, %s28, %s19
      %p30 = scmp.ge.s32.totalorder %s29, 2
      %s31 = scalar_select %p30, 0, %s29
      %s32 = ssub.s32 %s19, %s31
      %p33 = scmp.eq.s32.totalorder %s32, 0
      %s35 = sadd.s32 %s34, 1
      %s36 = scalar_select %p33, %s34, %s35
      %p39 = pneg %p33
      %p40 = scmp.eq.s32.totalorder %s12, 3
      %p41 = por %p39, %p40
      %p42 = scmp.ne.s32.totalorder %s34, %s37
      %p43 = scmp.eq.s32.totalorder %s12, 0
      %p44 = por %p42, %p43
      %p45 = scmp.ne.s32.totalorder %s34, %s37
      %p46 = scmp.eq.s32.totalorder %s17, 3
      %p47 = por %p45, %p46
      %p48 = scmp.ne.s32.totalorder %s37, %s38
      %p49 = scmp.eq.s32.totalorder %s17, 0
      %p50 = por %p48, %p49
      %p51 = scmp.ne.s32.totalorder %s37, %s38
      %p52 = scmp.eq.s32.totalorder %s18, 3
      %p53 = por %p51, %p52
      %p55 = scmp.ne.s32.totalorder %s38, %s54
      %p56 = scmp.eq.s32.totalorder %s18, 0
      %p57 = por %p55, %p56
      %s58 = ssub.s32 %s20, %s27
      %p59 = scmp.eq.s32.totalorder %s58, 0
      %s61 = sadd.s32 %s60, 1
      %s62 = scalar_select %p59, %s60, %s61
      %p65 = pneg %p59
      %p66 = scmp.eq.s32.totalorder %s12, 3
      %p67 = por %p65, %p66
      %p68 = scmp.ne.s32.totalorder %s60, %s63
      %p69 = scmp.eq.s32.totalorder %s12, 0
      %p70 = por %p68, %p69
      %p71 = scmp.ne.s32.totalorder %s60, %s63
      %p72 = scmp.eq.s32.totalorder %s17, 3
      %p73 = por %p71, %p72
      %p74 = scmp.ne.s32.totalorder %s63, %s64
      %p75 = scmp.eq.s32.totalorder %s17, 0
      %p76 = por %p74, %p75
      %p77 = scmp.ne.s32.totalorder %s63, %s64
      %p78 = scmp.eq.s32.totalorder %s18, 3
      %p79 = por %p77, %p78
      %p81 = scmp.ne.s32.totalorder %s64, %s80
      %p82 = scmp.eq.s32.totalorder %s18, 0
      %p83 = por %p81, %p82
      %s84 = ssub.s32 %s20, %s27
      %p85 = scmp.eq.s32.totalorder %s84, 0
      %s87 = sadd.s32 %s86, 1
      %s88 = scalar_select %p85, %s86, %s87
      %p91 = pneg %p85
      %p92 = scmp.eq.s32.totalorder %s12, 3
      %p93 = por %p91, %p92
      %p94 = scmp.ne.s32.totalorder %s86, %s89
      %p95 = scmp.eq.s32.totalorder %s12, 0
      %p96 = por %p94, %p95
      %p97 = scmp.ne.s32.totalorder %s86, %s89
      %p98 = scmp.eq.s32.totalorder %s17, 3
      %p99 = por %p97, %p98
      %p100 = scmp.ne.s32.totalorder %s89, %s90
      %p101 = scmp.eq.s32.totalorder %s17, 0
      %p102 = por %p100, %p101
      %p103 = scmp.ne.s32.totalorder %s89, %s90
      %p104 = scmp.eq.s32.totalorder %s18, 3
      %p105 = por %p103, %p104
      %p107 = scmp.ne.s32.totalorder %s90, %s106
      %p108 = scmp.eq.s32.totalorder %s18, 0
      %p109 = por %p107, %p108
      %s110 = ssub.s32 %s19, %s31
      %p111 = scmp.eq.s32.totalorder %s110, 0
      %s113 = sadd.s32 %s112, 1
      %s114 = scalar_select %p111, %s112, %s113
      %p117 = pneg %p111
      %p118 = scmp.eq.s32.totalorder %s12, 3
      %p119 = por %p117, %p118
      %p120 = scmp.ne.s32.totalorder %s112, %s115
      %p121 = scmp.eq.s32.totalorder %s12, 0
      %p122 = por %p120, %p121
      %p123 = scmp.ne.s32.totalorder %s112, %s115
      %p124 = scmp.eq.s32.totalorder %s17, 3
      %p125 = por %p123, %p124
      %p126 = scmp.ne.s32.totalorder %s115, %s116
      %p127 = scmp.eq.s32.totalorder %s17, 0
      %p128 = por %p126, %p127
      %p129 = scmp.ne.s32.totalorder %s115, %s116
      %p130 = scmp.eq.s32.totalorder %s18, 3
      %p131 = por %p129, %p130
      %p133 = scmp.ne.s32.totalorder %s116, %s132
      %p134 = scmp.eq.s32.totalorder %s18, 0
      %p135 = por %p133, %p134
      %p136 = scmp.le.s32.totalorder 1, %s12
      %p137 = scmp.lt.s32.totalorder %s12, 5
      %p138 = pnand %p136, %p137
      %p139 = pneg %p138
      // Predicated region
      $region9: #{megatron_mlp_forward.1} parent=5 // pred_check
        _
      $region10: #{megatron_mlp_forward.1} parent=5 // pred_check_branch
        %141 = sbr.rel (%p138) target = $region12
      $region11: #{megatron_mlp_forward.1} parent=5 // pred_region
        %s142 = ssub.s32 %s12, 1
      $region12: #{megatron_mlp_forward.1} parent=5 // pred_fallthru
        _
      %p143 = scmp.lt.s32.totalorder %s12, 4
      // Predicated region
      $region13: #{megatron_mlp_forward.1} parent=5 // pred_check
        %p144 = pneg %p143
      $region14: #{megatron_mlp_forward.1} parent=5 // pred_check_branch
        %146 = sbr.rel (%p144) target = $region16
      $region15: #{megatron_mlp_forward.1} parent=5 // pred_region
        // Predicated region
        $region17: #{megatron_mlp_forward.1} parent=15 // pred_check
          %p147 = pneg %p44
        $region18: #{megatron_mlp_forward.1} parent=15 // pred_check_branch
          %149 = sbr.rel (%p147) target = $region20
        $region19: #{megatron_mlp_forward.1} parent=15 // pred_region
          %s150 = smul.u32 8, %s19
          %p151 = scmp.lt.s32.totalorder %s150, 15
          %s152 = scalar_select %p151, %s150, 15
          %s153 = smul.addr %s152, 4
          %s154 = scalar_lea.vmem %s0, %s153
          %s155 = smul.u32 8, %s19
        $region20: #{megatron_mlp_forward.1} parent=15 // pred_fallthru
          _
        // Predicated region
        $region21: #{megatron_mlp_forward.1} parent=15 // pred_check
          %p156 = pneg %p70
        $region22: #{megatron_mlp_forward.1} parent=15 // pred_check_branch
          %158 = sbr.rel (%p156) target = $region24
        $region23: #{megatron_mlp_forward.1} parent=15 // pred_region
          %s159 = sand.u32 %s60, 1
          %s160 = sand.u32 %s60, 1
          %s161 = smul.addr %s160, 64
          %s162 = scalar_lea.vmem [#allocation3], %s161
          %s163 = smul.addr %s20, 4
          %s164 = scalar_lea.vmem %s1, %s163
          // Predicated region
          $region25: #{megatron_mlp_forward.1} parent=23 // pred_check
            _
          $region26: #{megatron_mlp_forward.1} parent=23 // pred_check_branch
            %166 = sbr.rel (0) target = $region28
          $region27: #{megatron_mlp_forward.1} parent=23 // pred_region
            // Predicated region
            $region29: #{megatron_mlp_forward.1} parent=27 // pred_check
              _
            $region30: #{megatron_mlp_forward.1} parent=27 // pred_check_branch
              %168 = sbr.rel target = $region32
            $region31: #{megatron_mlp_forward.1} parent=27 // pred_region
              // Predicated region
              $region44: #{megatron_mlp_forward.1} parent=31 // pred_check
                _
              $region45: #{megatron_mlp_forward.1} parent=31 // pred_check_branch
                %213 = sbr.rel (0) target = $region47
              $region46: #{megatron_mlp_forward.1} parent=31 // pred_region
                loop: start=0, step=1, limit=1
                $region48: #{megatron_mlp_forward.1} parent=46 // loop_pre_header
                  _
                $region49: #{megatron_mlp_forward.1} parent=46 // loop_header
                  %s215 = sphi 0, %s219
                  %p216 = scmp.ge.s32.totalorder %s215, 1
                  %s220 = sphi %s164, %s164
                  %s221 = sphi %s162, %s162
                $region50: #{megatron_mlp_forward.1} parent=46 // loop_header_branch
                  %218 = sbr.rel (%p216) target = $region54
                $region51: #{megatron_mlp_forward.1} parent=46 // loop_body
                  _
                $region52: #{megatron_mlp_forward.1} parent=46 // loop_footer
                  %s219 = sadd.s32 1, %s215
                $region53: #{megatron_mlp_forward.1} parent=46 // loop_footer_branch
                  %214 = sbr.rel target = $region49
                $region54: #{megatron_mlp_forward.1} parent=46 // loop_exit
                  _
                loop: start=0, step=1, limit=1
                $region55: #{megatron_mlp_forward.1} parent=46 // loop_pre_header
                  _
                $region56: #{megatron_mlp_forward.1} parent=46 // loop_header
                  %s224 = sphi 0, %s228
                  %p225 = scmp.ge.s32.totalorder %s224, 1
                  %s229 = sphi %s164, %s164
                  %s230 = sphi %s162, %s162
                $region57: #{megatron_mlp_forward.1} parent=46 // loop_header_branch
                  %227 = sbr.rel (%p225) target = $region61
                $region58: #{megatron_mlp_forward.1} parent=46 // loop_body
                  %v231 = vld [vmem:[%s229] sm:$0xf]
                  %232 = vst [vmem:[%s230] sm:$0xf] %v231
                  %v233 = vld [vmem:[%s229 + $0x8] sm:$0xf]
                  %234 = vst [vmem:[%s230 + $0x4] sm:$0xf] %v233
                  %v235 = vld [vmem:[%s229 + $0x10] sm:$0xf]
                  %236 = vst [vmem:[%s230 + $0x8] sm:$0xf] %v235
                  %v237 = vld [vmem:[%s229 + $0x18] sm:$0xf]
                  %238 = vst [vmem:[%s230 + $0xc] sm:$0xf] %v237
                  %v239 = vld [vmem:[%s229 + $0x20] sm:$0xf]
                  %240 = vst [vmem:[%s230 + $0x10] sm:$0xf] %v239
                  %v241 = vld [vmem:[%s229 + $0x28] sm:$0xf]
                  %242 = vst [vmem:[%s230 + $0x14] sm:$0xf] %v241
                  %v243 = vld [vmem:[%s229 + $0x30] sm:$0xf]
                  %244 = vst [vmem:[%s230 + $0x18] sm:$0xf] %v243
                  %v245 = vld [vmem:[%s229 + $0x38] sm:$0xf]
                  %246 = vst [vmem:[%s230 + $0x1c] sm:$0xf] %v245
                  %v247 = vld [vmem:[%s229 + $0x40] sm:$0xf]
                  %248 = vst [vmem:[%s230 + $0x20] sm:$0xf] %v247
                  %v249 = vld [vmem:[%s229 + $0x48] sm:$0xf]
                  %250 = vst [vmem:[%s230 + $0x24] sm:$0xf] %v249
                  %v251 = vld [vmem:[%s229 + $0x50] sm:$0xf]
                  %252 = vst [vmem:[%s230 + $0x28] sm:$0xf] %v251
                  %v253 = vld [vmem:[%s229 + $0x58] sm:$0xf]
                  %254 = vst [vmem:[%s230 + $0x2c] sm:$0xf] %v253
                  %v255 = vld [vmem:[%s229 + $0x60] sm:$0xf]
                  %256 = vst [vmem:[%s230 + $0x30] sm:$0xf] %v255
                  %v257 = vld [vmem:[%s229 + $0x68] sm:$0xf]
                  %258 = vst [vmem:[%s230 + $0x34] sm:$0xf] %v257
                  %v259 = vld [vmem:[%s229 + $0x70] sm:$0xf]
                  %260 = vst [vmem:[%s230 + $0x38] sm:$0xf] %v259
                  %v261 = vld [vmem:[%s229 + $0x78] sm:$0xf]
                  %262 = vst [vmem:[%s230 + $0x3c] sm:$0xf] %v261
                $region59: #{megatron_mlp_forward.1} parent=46 // loop_footer
                  %s228 = sadd.s32 1, %s224
                $region60: #{megatron_mlp_forward.1} parent=46 // loop_footer_branch
                  %223 = sbr.rel target = $region56
                $region61: #{megatron_mlp_forward.1} parent=46 // loop_exit
                  _
              $region47: #{megatron_mlp_forward.1} parent=31 // pred_fallthru
                _
            $region32: #{megatron_mlp_forward.1} parent=27 // pred_fallthru
              _
            // Predicated region
            $region33: #{megatron_mlp_forward.1} parent=27 // pred_check
              _
            $region34: #{megatron_mlp_forward.1} parent=27 // pred_check_branch
              %170 = sbr.rel (0) target = $region36
            $region35: #{megatron_mlp_forward.1} parent=27 // pred_region
              loop: start=0, step=1, limit=1
              $region37: #{megatron_mlp_forward.1} parent=35 // loop_pre_header
                _
              $region38: #{megatron_mlp_forward.1} parent=35 // loop_header
                %s173 = sphi 0, %s177
                %p174 = scmp.ge.s32.totalorder %s173, 1
                %s178 = sphi %s164, %s164
                %s179 = sphi %s162, %s162
              $region39: #{megatron_mlp_forward.1} parent=35 // loop_header_branch
                %176 = sbr.rel (%p174) target = $region43
              $region40: #{megatron_mlp_forward.1} parent=35 // loop_body
                %v180 = vld [vmem:[%s178] sm:$0xf]
                %181 = vst [vmem:[%s179] sm:$0xf] %v180
                %v182 = vld [vmem:[%s178 + $0x8] sm:$0xf]
                %183 = vst [vmem:[%s179 + $0x4] sm:$0xf] %v182
                %v184 = vld [vmem:[%s178 + $0x10] sm:$0xf]
                %185 = vst [vmem:[%s179 + $0x8] sm:$0xf] %v184
                %v186 = vld [vmem:[%s178 + $0x18] sm:$0xf]
                %187 = vst [vmem:[%s179 + $0xc] sm:$0xf] %v186
                %v188 = vld [vmem:[%s178 + $0x20] sm:$0xf]
                %189 = vst [vmem:[%s179 + $0x10] sm:$0xf] %v188
                %v190 = vld [vmem:[%s178 + $0x28] sm:$0xf]
                %191 = vst [vmem:[%s179 + $0x14] sm:$0xf] %v190
                %v192 = vld [vmem:[%s178 + $0x30] sm:$0xf]
                %193 = vst [vmem:[%s179 + $0x18] sm:$0xf] %v192
                %v194 = vld [vmem:[%s178 + $0x38] sm:$0xf]
                %195 = vst [vmem:[%s179 + $0x1c] sm:$0xf] %v194
                %v196 = vld [vmem:[%s178 + $0x40] sm:$0xf]
                %197 = vst [vmem:[%s179 + $0x20] sm:$0xf] %v196
                %v198 = vld [vmem:[%s178 + $0x48] sm:$0xf]
                %199 = vst [vmem:[%s179 + $0x24] sm:$0xf] %v198
                %v200 = vld [vmem:[%s178 + $0x50] sm:$0xf]
                %201 = vst [vmem:[%s179 + $0x28] sm:$0xf] %v200
                %v202 = vld [vmem:[%s178 + $0x58] sm:$0xf]
                %203 = vst [vmem:[%s179 + $0x2c] sm:$0xf] %v202
                %v204 = vld [vmem:[%s178 + $0x60] sm:$0xf]
                %205 = vst [vmem:[%s179 + $0x30] sm:$0xf] %v204
                %v206 = vld [vmem:[%s178 + $0x68] sm:$0xf]
                %207 = vst [vmem:[%s179 + $0x34] sm:$0xf] %v206
                %v208 = vld [vmem:[%s178 + $0x70] sm:$0xf]
                %209 = vst [vmem:[%s179 + $0x38] sm:$0xf] %v208
                %v210 = vld [vmem:[%s178 + $0x78] sm:$0xf]
                %211 = vst [vmem:[%s179 + $0x3c] sm:$0xf] %v210
              $region41: #{megatron_mlp_forward.1} parent=35 // loop_footer
                %s177 = sadd.s32 1, %s173
              $region42: #{megatron_mlp_forward.1} parent=35 // loop_footer_branch
                %172 = sbr.rel target = $region38
              $region43: #{megatron_mlp_forward.1} parent=35 // loop_exit
                _
            $region36: #{megatron_mlp_forward.1} parent=27 // pred_fallthru
              _
          $region28: #{megatron_mlp_forward.1} parent=23 // pred_fallthru
            _
          %263 = vnop
        $region24: #{megatron_mlp_forward.1} parent=15 // pred_fallthru
          _
        // Predicated region
        $region62: #{megatron_mlp_forward.1} parent=15 // pred_check
          %p264 = pneg %p96
        $region63: #{megatron_mlp_forward.1} parent=15 // pred_check_branch
          %266 = sbr.rel (%p264) target = $region65
        $region64: #{megatron_mlp_forward.1} parent=15 // pred_region
          %s267 = smul.u32 16, %s20
          %p268 = scmp.lt.s32.totalorder %s267, 31
          %s269 = scalar_select %p268, %s267, 31
          %s270 = smul.addr %s269, 4
          %s271 = scalar_lea.vmem %s2, %s270
          %s272 = smul.u32 16, %s20
        $region65: #{megatron_mlp_forward.1} parent=15 // pred_fallthru
          _
      $region16: #{megatron_mlp_forward.1} parent=5 // pred_fallthru
        _
      %p273 = scmp.le.s32.totalorder 1, %s12
      %p274 = scmp.lt.s32.totalorder %s12, 5
      %p275 = pnand %p273, %p274
      %p276 = pneg %p275
      // Predicated region
      $region66: #{megatron_mlp_forward.1} parent=5 // pred_check
        _
      $region67: #{megatron_mlp_forward.1} parent=5 // pred_check_branch
        %278 = sbr.rel (%p275) target = $region69
      $region68: #{megatron_mlp_forward.1} parent=5 // pred_region
        %s279 = ssub.s32 %s12, 1
        %s280 = sand.u32 %s63, 1
        %s281 = sand.u32 %s63, 1
        %s282 = smul.addr %s281, 64
        %s283 = scalar_lea.vmem [#allocation3], %s282
        // Predicated region
        $region70: #{megatron_mlp_forward.1} parent=68 // pred_check
          %p284 = pneg %p76
        $region71: #{megatron_mlp_forward.1} parent=68 // pred_check_branch
          %286 = sbr.rel (%p284) target = $region73
        $region72: #{megatron_mlp_forward.1} parent=68 // pred_region
          _
        $region73: #{megatron_mlp_forward.1} parent=68 // pred_fallthru
          _
        %s287 = smul.u32 8, %s21
        %p288 = scmp.lt.s32.totalorder %s287, 15
        %s289 = scalar_select %p288, %s287, 15
        %s290 = smul.addr %s289, 4
        %s291 = scalar_lea.vmem %s0, %s290
        %p292 = pneg %p50
        %p293 = pneg %p47
        %s294 = sand.u32 %s63, 1
        %s295 = sand.u32 %s63, 1
        %s296 = smul.addr %s295, 64
        %s297 = scalar_lea.vmem [#allocation3], %s296
        %p298 = pneg %p76
        %p299 = pneg %p73
        %s300 = smul.u32 16, %s22
        %p301 = scmp.lt.s32.totalorder %s300, 31
        %s302 = scalar_select %p301, %s300, 31
        %s303 = smul.addr %s302, 4
        %s304 = scalar_lea.vmem %s2, %s303
        %p305 = pneg %p102
        %p306 = pneg %p99
        %p307 = pneg %p128
        %p308 = pneg %p125
        %s309 = sand.u32 %s115, 1
        %s310 = scalar_lea.sflag [#allocation5], %s309
        %s311 = sand.u32 %s115, 1
        %s312 = smul.addr %s311, 32
        %s313 = scalar_lea.vmem [#allocation4], %s312
        %s314 = smul.u32 8, %s21
        %p315 = scmp.lt.s32.totalorder %s314, 15
        %s316 = scalar_select %p315, %s314, 15
        %s317 = smul.addr %s316, 4
        %s318 = scalar_lea.vmem %s0, %s317
        %s319 = smul.u32 8, %s21
        %s320 = smul.u32 16, %s22
        %p321 = scmp.lt.s32.totalorder %s320, 31
        %s322 = scalar_select %p321, %s320, 31
        %s323 = smul.addr %s322, 4
        %s324 = scalar_lea.vmem %s2, %s323
        %s325 = smul.u32 16, %s22
        %s326 = smul.u32 8, %s21
        %p328 = scmp.eq.s32.totalorder %s22, 0
        // Predicated region
        $region74: #{megatron_mlp_forward.1} parent=68 // pred_check
          %p329 = pneg %p328
        $region75: #{megatron_mlp_forward.1} parent=68 // pred_check_branch
          %331 = sbr.rel (%p329) target = $region77
        $region76: #{megatron_mlp_forward.1} parent=68 // pred_region
          %332 = vst [vmem:[#allocation2] sm:$0xff] 0.0
          %333 = vst [vmem:[#allocation2 + $0x8] sm:$0xff] 0.0
          %334 = vst [vmem:[#allocation2 + $0x10] sm:$0xff] 0.0
          %335 = vst [vmem:[#allocation2 + $0x18] sm:$0xff] 0.0
          %336 = vst [vmem:[#allocation2 + $0x20] sm:$0xff] 0.0
          %337 = vst [vmem:[#allocation2 + $0x28] sm:$0xff] 0.0
          %338 = vst [vmem:[#allocation2 + $0x30] sm:$0xff] 0.0
          %339 = vst [vmem:[#allocation2 + $0x38] sm:$0xff] 0.0
        $region77: #{megatron_mlp_forward.1} parent=68 // pred_fallthru
          _
        %v340 = vld [vmem:[%s318] sm:$0xf]
        %v341 = vld [vmem:[%s318 + $0x4] sm:$0xf]
        %v342 = vld [vmem:[%s318 + $0x8] sm:$0xf]
        %v343 = vld [vmem:[%s318 + $0xc] sm:$0xf]
        %v344 = vld [vmem:[%s318 + $0x10] sm:$0xf]
        %v345 = vld [vmem:[%s318 + $0x14] sm:$0xf]
        %v346 = vld [vmem:[%s318 + $0x18] sm:$0xf]
        %v347 = vld [vmem:[%s318 + $0x1c] sm:$0xf]
        %v348 = vld [vmem:[%s283] sm:$0xf]
        %v349 = vld [vmem:[%s283 + $0x4] sm:$0xf]
        %v350 = vld [vmem:[%s283 + $0x8] sm:$0xf]
        %v351 = vld [vmem:[%s283 + $0xc] sm:$0xf]
        %v352 = vld [vmem:[%s283 + $0x10] sm:$0xf]
        %v353 = vld [vmem:[%s283 + $0x14] sm:$0xf]
        %v354 = vld [vmem:[%s283 + $0x18] sm:$0xf]
        %v355 = vld [vmem:[%s283 + $0x1c] sm:$0xf]
        %v356 = vld [vmem:[%s283 + $0x20] sm:$0xf]
        %v357 = vld [vmem:[%s283 + $0x24] sm:$0xf]
        %v358 = vld [vmem:[%s283 + $0x28] sm:$0xf]
        %v359 = vld [vmem:[%s283 + $0x2c] sm:$0xf]
        %v360 = vld [vmem:[%s283 + $0x30] sm:$0xf]
        %v361 = vld [vmem:[%s283 + $0x34] sm:$0xf]
        %v362 = vld [vmem:[%s283 + $0x38] sm:$0xf]
        %v363 = vld [vmem:[%s283 + $0x3c] sm:$0xf]
        %v372 = vunpack.c.l.b16 %v340
        %v373 = vunpack.c.l.b16 %v341
        %v374 = vunpack.c.l.b16 %v342
        %v375 = vunpack.c.l.b16 %v343
        %v376 = vunpack.c.l.b16 %v344
        %v377 = vunpack.c.l.b16 %v345
        %v378 = vunpack.c.l.b16 %v346
        %v379 = vunpack.c.l.b16 %v347
        %v380 = vpack.c.b16 %v373, %v372
        %v381 = vpack.c.b16 %v375, %v374
        %v382 = vpack.c.b16 %v377, %v376
        %v383 = vpack.c.b16 %v379, %v378
        %v404 = vunpack.c.l.b16 %v348
        %v405 = vunpack.c.l.b16 %v349
        %v406 = vunpack.c.l.b16 %v350
        %v407 = vunpack.c.l.b16 %v351
        %v408 = vunpack.c.l.b16 %v352
        %v409 = vunpack.c.l.b16 %v353
        %v410 = vunpack.c.l.b16 %v354
        %v411 = vunpack.c.l.b16 %v355
        %v412 = vunpack.c.l.b16 %v356
        %v413 = vunpack.c.l.b16 %v357
        %v414 = vunpack.c.l.b16 %v358
        %v415 = vunpack.c.l.b16 %v359
        %v416 = vunpack.c.l.b16 %v360
        %v417 = vunpack.c.l.b16 %v361
        %v418 = vunpack.c.l.b16 %v362
        %v419 = vunpack.c.l.b16 %v363
        %v420 = vpack.c.b16 %v405, %v404
        %v421 = vpack.c.b16 %v407, %v406
        %v422 = vpack.c.b16 %v409, %v408
        %v423 = vpack.c.b16 %v411, %v410
        %v424 = vpack.c.b16 %v413, %v412
        %v425 = vpack.c.b16 %v415, %v414
        %v426 = vpack.c.b16 %v417, %v416
        %v427 = vpack.c.b16 %v419, %v418
        %436 = vmatprep.subr.bf16.mxu0 0
        %437 = vmatpush1.bf16.msra.mxu0 %v420
        %438 = vmatprep.subr.bf16.mxu0 0
        %439 = vmatpush1.bf16.msra.mxu0 %v421
        %440 = vmatprep.subr.bf16.mxu0 0
        %441 = vmatpush1.bf16.msra.mxu0 %v422
        %442 = vmatprep.subr.bf16.mxu0 0
        %443 = vmatpush1.bf16.msra.mxu0 %v423
        %444 = vmatprep.subr.bf16.mxu0 0
        %445 = vmatpush1.bf16.msra.mxu0 %v424
        %446 = vmatprep.subr.bf16.mxu0 0
        %447 = vmatpush1.bf16.msra.mxu0 %v425
        %448 = vmatprep.subr.bf16.mxu0 0
        %449 = vmatpush1.bf16.msra.mxu0 %v426
        %450 = vmatprep.subr.bf16.mxu0 0
        %451 = vmatpush1.bf16.msra.mxu0 %v427
        %452 = vmatprep.subr.bf16.mxu0 0
        %453 = vmatpush1.bf16.msra.mxu0 0
        %454 = vmatprep.subr.bf16.mxu0 0
        %455 = vmatpush1.bf16.msra.mxu0 0
        %456 = vmatprep.subr.bf16.mxu0 0
        %457 = vmatpush1.bf16.msra.mxu0 0
        %458 = vmatprep.subr.bf16.mxu0 0
        %459 = vmatpush1.bf16.msra.mxu0 0
        %460 = vmatprep.subr.bf16.mxu0 0
        %461 = vmatpush1.bf16.msra.mxu0 0
        %462 = vmatprep.subr.bf16.mxu0 0
        %463 = vmatpush1.bf16.msra.mxu0 0
        %464 = vmatprep.subr.bf16.mxu0 0
        %465 = vmatpush1.bf16.msra.mxu0 0
        %466 = vmatprep.subr.bf16.mxu0 0
        %467 = vmatpush1.bf16.msra.mxu0 0
        %468 = vmatprep.mubr.bf16.mxu0 0
        %469 = vmatmul.mubr.bf16.gmra.mrb[0].mxu0 %v380
        %v470 = vpop.f32.mrb[0].mxu0
        %v471 = vadd.f32 0.0, %v470
        %v472 = vpop.f32.mrb[0].mxu0
        %v473 = vpop.f32.mrb[0].mxu0
        %v474 = vadd.f32 0.0, %v473
        %v475 = vpop.f32.mrb[0].mxu0
        %476 = vmatprep.mubr.bf16.mxu0 0
        %477 = vmatmul.mubr.bf16.gmra.mrb[0].mxu0 %v381
        %v478 = vpop.f32.mrb[0].mxu0
        %v479 = vadd.f32 0.0, %v478
        %v480 = vpop.f32.mrb[0].mxu0
        %v481 = vpop.f32.mrb[0].mxu0
        %v482 = vadd.f32 0.0, %v481
        %v483 = vpop.f32.mrb[0].mxu0
        %484 = vmatprep.mubr.bf16.mxu0 0
        %485 = vmatmul.mubr.bf16.gmra.mrb[0].mxu0 %v382
        %v486 = vpop.f32.mrb[0].mxu0
        %v487 = vadd.f32 0.0, %v486
        %v488 = vpop.f32.mrb[0].mxu0
        %v489 = vpop.f32.mrb[0].mxu0
        %v490 = vadd.f32 0.0, %v489
        %v491 = vpop.f32.mrb[0].mxu0
        %492 = vmatprep.mubr.bf16.mxu0 0
        %493 = vmatmul.mubr.bf16.gmra.mrb[0].mxu0 %v383
        %v494 = vpop.f32.mrb[0].mxu0
        %v495 = vadd.f32 0.0, %v494
        %v496 = vpop.f32.mrb[0].mxu0
        %v497 = vpop.f32.mrb[0].mxu0
        %v498 = vadd.f32 0.0, %v497
        %v499 = vpop.f32.mrb[0].mxu0
        %500 = vdwg.mxu0
        %v501 = vmul.f32 %v471, 0.5
        %v502 = vmul.f32 %v474, 0.5
        %v503 = vmul.f32 %v479, 0.5
        %v504 = vmul.f32 %v482, 0.5
        %v505 = vmul.f32 %v487, 0.5
        %v506 = vmul.f32 %v490, 0.5
        %v507 = vmul.f32 %v495, 0.5
        %v508 = vmul.f32 %v498, 0.5
        %v509 = vmul.f32 %v471, 0.70710677
        %v510 = vmul.f32 %v474, 0.70710677
        %v511 = vmul.f32 %v479, 0.70710677
        %v512 = vmul.f32 %v482, 0.70710677
        %v513 = vmul.f32 %v487, 0.70710677
        %v514 = vmul.f32 %v490, 0.70710677
        %v515 = vmul.f32 %v495, 0.70710677
        %v516 = vmul.f32 %v498, 0.70710677
        %v517 = verf.f32.pop %v509
        %v518 = verf.f32.pop %v510
        %v519 = verf.f32.pop %v511
        %v520 = verf.f32.pop %v512
        %v521 = verf.f32.pop %v513
        %v522 = verf.f32.pop %v514
        %v523 = verf.f32.pop %v515
        %v524 = verf.f32.pop %v516
        %v525 = vadd.f32 %v517, 1.0
        %v526 = vadd.f32 %v518, 1.0
        %v527 = vadd.f32 %v519, 1.0
        %v528 = vadd.f32 %v520, 1.0
        %v529 = vadd.f32 %v521, 1.0
        %v530 = vadd.f32 %v522, 1.0
        %v531 = vadd.f32 %v523, 1.0
        %v532 = vadd.f32 %v524, 1.0
        %v533 = vmul.f32 %v501, %v525
        %v534 = vmul.f32 %v502, %v526
        %v535 = vmul.f32 %v503, %v527
        %v536 = vmul.f32 %v504, %v528
        %v537 = vmul.f32 %v505, %v529
        %v538 = vmul.f32 %v506, %v530
        %v539 = vmul.f32 %v507, %v531
        %v540 = vmul.f32 %v508, %v532
        %v541 = vld [vmem:[#allocation2] sm:$0xff]
        %v542 = vld [vmem:[#allocation2 + $0x8] sm:$0xff]
        %v543 = vld [vmem:[#allocation2 + $0x10] sm:$0xff]
        %v544 = vld [vmem:[#allocation2 + $0x18] sm:$0xff]
        %v545 = vld [vmem:[#allocation2 + $0x20] sm:$0xff]
        %v546 = vld [vmem:[#allocation2 + $0x28] sm:$0xff]
        %v547 = vld [vmem:[#allocation2 + $0x30] sm:$0xff]
        %v548 = vld [vmem:[#allocation2 + $0x38] sm:$0xff]
        %v549 = vpack.c.bf16 %v534, %v533
        %v550 = vpack.c.bf16 %v536, %v535
        %v551 = vpack.c.bf16 %v538, %v537
        %v552 = vpack.c.bf16 %v540, %v539
        %v553 = vld [vmem:[%s324] sm:$0xf]
        %v554 = vld [vmem:[%s324 + $0x4] sm:$0xf]
        %v555 = vld [vmem:[%s324 + $0x8] sm:$0xf]
        %v556 = vld [vmem:[%s324 + $0xc] sm:$0xf]
        %v557 = vld [vmem:[%s324 + $0x10] sm:$0xf]
        %v558 = vld [vmem:[%s324 + $0x14] sm:$0xf]
        %v559 = vld [vmem:[%s324 + $0x18] sm:$0xf]
        %v560 = vld [vmem:[%s324 + $0x1c] sm:$0xf]
        %v561 = vld [vmem:[%s324 + $0x20] sm:$0xf]
        %v562 = vld [vmem:[%s324 + $0x24] sm:$0xf]
        %v563 = vld [vmem:[%s324 + $0x28] sm:$0xf]
        %v564 = vld [vmem:[%s324 + $0x2c] sm:$0xf]
        %v565 = vld [vmem:[%s324 + $0x30] sm:$0xf]
        %v566 = vld [vmem:[%s324 + $0x34] sm:$0xf]
        %v567 = vld [vmem:[%s324 + $0x38] sm:$0xf]
        %v568 = vld [vmem:[%s324 + $0x3c] sm:$0xf]
        %v585 = vunpack.c.l.b16 %v553
        %v586 = vunpack.c.l.b16 %v554
        %v587 = vunpack.c.l.b16 %v555
        %v588 = vunpack.c.l.b16 %v556
        %v589 = vunpack.c.l.b16 %v557
        %v590 = vunpack.c.l.b16 %v558
        %v591 = vunpack.c.l.b16 %v559
        %v592 = vunpack.c.l.b16 %v560
        %v593 = vunpack.c.l.b16 %v561
        %v594 = vunpack.c.l.b16 %v562
        %v595 = vunpack.c.l.b16 %v563
        %v596 = vunpack.c.l.b16 %v564
        %v597 = vunpack.c.l.b16 %v565
        %v598 = vunpack.c.l.b16 %v566
        %v599 = vunpack.c.l.b16 %v567
        %v600 = vunpack.c.l.b16 %v568
        %v601 = vpack.c.b16 %v586, %v585
        %v602 = vpack.c.b16 %v588, %v587
        %v603 = vpack.c.b16 %v590, %v589
        %v604 = vpack.c.b16 %v592, %v591
        %v605 = vpack.c.b16 %v594, %v593
        %v606 = vpack.c.b16 %v596, %v595
        %v607 = vpack.c.b16 %v598, %v597
        %v608 = vpack.c.b16 %v600, %v599
        %617 = vmatprep.subr.bf16.mxu0 0
        %618 = vmatpush1.bf16.msra.mxu0 %v601
        %619 = vmatprep.subr.bf16.mxu0 0
        %620 = vmatpush1.bf16.msra.mxu0 %v602
        %621 = vmatprep.subr.bf16.mxu0 0
        %622 = vmatpush1.bf16.msra.mxu0 %v603
        %623 = vmatprep.subr.bf16.mxu0 0
        %624 = vmatpush1.bf16.msra.mxu0 %v604
        %625 = vmatprep.subr.bf16.mxu0 0
        %626 = vmatpush1.bf16.msra.mxu0 %v605
        %627 = vmatprep.subr.bf16.mxu0 0
        %628 = vmatpush1.bf16.msra.mxu0 %v606
        %629 = vmatprep.subr.bf16.mxu0 0
        %630 = vmatpush1.bf16.msra.mxu0 %v607
        %631 = vmatprep.subr.bf16.mxu0 0
        %632 = vmatpush1.bf16.msra.mxu0 %v608
        %633 = vmatprep.subr.bf16.mxu0 0
        %634 = vmatpush1.bf16.msra.mxu0 0
        %635 = vmatprep.subr.bf16.mxu0 0
        %636 = vmatpush1.bf16.msra.mxu0 0
        %637 = vmatprep.subr.bf16.mxu0 0
        %638 = vmatpush1.bf16.msra.mxu0 0
        %639 = vmatprep.subr.bf16.mxu0 0
        %640 = vmatpush1.bf16.msra.mxu0 0
        %641 = vmatprep.subr.bf16.mxu0 0
        %642 = vmatpush1.bf16.msra.mxu0 0
        %643 = vmatprep.subr.bf16.mxu0 0
        %644 = vmatpush1.bf16.msra.mxu0 0
        %645 = vmatprep.subr.bf16.mxu0 0
        %646 = vmatpush1.bf16.msra.mxu0 0
        %647 = vmatprep.subr.bf16.mxu0 0
        %648 = vmatpush1.bf16.msra.mxu0 0
        %649 = vmatprep.mubr.bf16.mxu0 0
        %650 = vmatmul.mubr.bf16.gmra.mrb[0].mxu0 %v549
        %v651 = vpop.f32.mrb[0].mxu0
        %v652 = vadd.f32 0.0, %v651
        %v653 = vpop.f32.mrb[0].mxu0
        %v654 = vpop.f32.mrb[0].mxu0
        %v655 = vadd.f32 0.0, %v654
        %v656 = vpop.f32.mrb[0].mxu0
        %657 = vmatprep.mubr.bf16.mxu0 0
        %658 = vmatmul.mubr.bf16.gmra.mrb[0].mxu0 %v550
        %v659 = vpop.f32.mrb[0].mxu0
        %v660 = vadd.f32 0.0, %v659
        %v661 = vpop.f32.mrb[0].mxu0
        %v662 = vpop.f32.mrb[0].mxu0
        %v663 = vadd.f32 0.0, %v662
        %v664 = vpop.f32.mrb[0].mxu0
        %665 = vmatprep.mubr.bf16.mxu0 0
        %666 = vmatmul.mubr.bf16.gmra.mrb[0].mxu0 %v551
        %v667 = vpop.f32.mrb[0].mxu0
        %v668 = vadd.f32 0.0, %v667
        %v669 = vpop.f32.mrb[0].mxu0
        %v670 = vpop.f32.mrb[0].mxu0
        %v671 = vadd.f32 0.0, %v670
        %v672 = vpop.f32.mrb[0].mxu0
        %673 = vmatprep.mubr.bf16.mxu0 0
        %674 = vmatmul.mubr.bf16.gmra.mrb[0].mxu0 %v552
        %v675 = vpop.f32.mrb[0].mxu0
        %v676 = vadd.f32 0.0, %v675
        %v677 = vpop.f32.mrb[0].mxu0
        %v678 = vpop.f32.mrb[0].mxu0
        %v679 = vadd.f32 0.0, %v678
        %v680 = vpop.f32.mrb[0].mxu0
        %681 = vdwg.mxu0
        %v682 = vadd.f32 %v541, %v652
        %v683 = vadd.f32 %v542, %v655
        %v684 = vadd.f32 %v543, %v660
        %v685 = vadd.f32 %v544, %v663
        %v686 = vadd.f32 %v545, %v668
        %v687 = vadd.f32 %v546, %v671
        %v688 = vadd.f32 %v547, %v676
        %v689 = vadd.f32 %v548, %v679
        %690 = vst [vmem:[#allocation2] sm:$0xff] %v682
        %691 = vst [vmem:[#allocation2 + $0x8] sm:$0xff] %v683
        %692 = vst [vmem:[#allocation2 + $0x10] sm:$0xff] %v684
        %693 = vst [vmem:[#allocation2 + $0x18] sm:$0xff] %v685
        %694 = vst [vmem:[#allocation2 + $0x20] sm:$0xff] %v686
        %695 = vst [vmem:[#allocation2 + $0x28] sm:$0xff] %v687
        %696 = vst [vmem:[#allocation2 + $0x30] sm:$0xff] %v688
        %697 = vst [vmem:[#allocation2 + $0x38] sm:$0xff] %v689
        %p698 = scmp.eq.s32.totalorder %s22, 1
        // Predicated region
        $region78: #{megatron_mlp_forward.1} parent=68 // pred_check
          %p699 = pneg %p698
        $region79: #{megatron_mlp_forward.1} parent=68 // pred_check_branch
          %701 = sbr.rel (%p699) target = $region81
        $region80: #{megatron_mlp_forward.1} parent=68 // pred_region
          %v702 = vld [vmem:[#allocation2] sm:$0xff]
          %v703 = vld [vmem:[#allocation2 + $0x8] sm:$0xff]
          %v704 = vld [vmem:[#allocation2 + $0x10] sm:$0xff]
          %v705 = vld [vmem:[#allocation2 + $0x18] sm:$0xff]
          %v706 = vld [vmem:[#allocation2 + $0x20] sm:$0xff]
          %v707 = vld [vmem:[#allocation2 + $0x28] sm:$0xff]
          %v708 = vld [vmem:[#allocation2 + $0x30] sm:$0xff]
          %v709 = vld [vmem:[#allocation2 + $0x38] sm:$0xff]
          %v710 = vpack.c.bf16 %v703, %v702
          %v711 = vpack.c.bf16 %v705, %v704
          %v712 = vpack.c.bf16 %v707, %v706
          %v713 = vpack.c.bf16 %v709, %v708
          %v718 = vunpack.c.l.b16 %v710
          %v719 = vunpack.c.h.b16 %v710
          %v720 = vunpack.c.l.b16 %v711
          %v721 = vunpack.c.h.b16 %v711
          %v722 = vunpack.c.l.b16 %v712
          %v723 = vunpack.c.h.b16 %v712
          %v724 = vunpack.c.l.b16 %v713
          %v725 = vunpack.c.h.b16 %v713
          %v726 = vpack.c.b16 %v718, %v718
          %v727 = vpack.c.b16 %v719, %v719
          %v728 = vpack.c.b16 %v720, %v720
          %v729 = vpack.c.b16 %v721, %v721
          %v730 = vpack.c.b16 %v722, %v722
          %v731 = vpack.c.b16 %v723, %v723
          %v732 = vpack.c.b16 %v724, %v724
          %v733 = vpack.c.b16 %v725, %v725
          %742 = vst [vmem:[%s313] sm:$0xf] %v726
          %743 = vst [vmem:[%s313 + $0x4] sm:$0xf] %v727
          %744 = vst [vmem:[%s313 + $0x8] sm:$0xf] %v728
          %745 = vst [vmem:[%s313 + $0xc] sm:$0xf] %v729
          %746 = vst [vmem:[%s313 + $0x10] sm:$0xf] %v730
          %747 = vst [vmem:[%s313 + $0x14] sm:$0xf] %v731
          %748 = vst [vmem:[%s313 + $0x18] sm:$0xf] %v732
          %749 = vst [vmem:[%s313 + $0x1c] sm:$0xf] %v733
        $region81: #{megatron_mlp_forward.1} parent=68 // pred_fallthru
          _
        %s750 = sand.u32 %s115, 1
        %s751 = scalar_lea.sflag [#allocation5], %s750
        %s752 = sand.u32 %s115, 1
        %s753 = smul.addr %s752, 32
        %s754 = scalar_lea.vmem [#allocation4], %s753
        // Predicated region
        $region82: #{megatron_mlp_forward.1} parent=68 // pred_check
          %p755 = pneg %p125
        $region83: #{megatron_mlp_forward.1} parent=68 // pred_check_branch
          %757 = sbr.rel (%p755) target = $region85
        $region84: #{megatron_mlp_forward.1} parent=68 // pred_region
          %s758 = smul.u32 8, %s21
          %s760 = ssub.s32 512, 512
          %761 = vsyncadd %s751, %s760
          %s762 = smul.addr %s758, 64
          %s763 = scalar_lea.hbm %s3, %s762
          %s764 = sshll.u32 %s754, 4
          %s765 = int_to_ptr.vmem [resolvable:$true] %s764
          %770 = dma.vmem_to_hbm [thread:$0]  %s765, 512, %s763, %s751, 64, 64, 4
        $region85: #{megatron_mlp_forward.1} parent=68 // pred_fallthru
          _
      $region69: #{megatron_mlp_forward.1} parent=5 // pred_fallthru
        _
      %p771 = scmp.le.s32.totalorder 2, %s12
      // Predicated region
      $region86: #{megatron_mlp_forward.1} parent=5 // pred_check
        %p772 = pneg %p771
      $region87: #{megatron_mlp_forward.1} parent=5 // pred_check_branch
        %774 = sbr.rel (%p772) target = $region89
      $region88: #{megatron_mlp_forward.1} parent=5 // pred_region
        %s775 = ssub.s32 %s12, 2
        // Predicated region
        $region90: #{megatron_mlp_forward.1} parent=88 // pred_check
          %p776 = pneg %p131
        $region91: #{megatron_mlp_forward.1} parent=88 // pred_check_branch
          %778 = sbr.rel (%p776) target = $region93
        $region92: #{megatron_mlp_forward.1} parent=88 // pred_region
          %s779 = sand.u32 %s116, 1
          %s780 = scalar_lea.sflag [#allocation5], %s779
          %s781 = sand.u32 %s116, 1
          %s782 = smul.addr %s781, 32
          %s783 = scalar_lea.vmem [#allocation4], %s782
          %784 = dma.done %s780, 512
        $region93: #{megatron_mlp_forward.1} parent=88 // pred_fallthru
          _
      $region89: #{megatron_mlp_forward.1} parent=5 // pred_fallthru
        _
    $region6: #{megatron_mlp_forward.1} parent=1 // loop_footer
      %s16 = sadd.s32 1, %s12
    $region7: #{megatron_mlp_forward.1} parent=1 // loop_footer_branch
      %11 = sbr.rel target = $region3
    $region8: #{megatron_mlp_forward.1} parent=1 // loop_exit
      _
    %785 = vsyncpa [#allocation5], 1
    %s786 = scalar_lea.sflag [#allocation5], 1
    %787 = vsyncpa %s786, 1

</llo_original>
